<compile_context>
chip_gen: v7x
topology: tpu7x:2x2x1
jax: 0.10.0
libtpu: 0.0.40
codegen_flags: <defaults>
</compile_context>

<pallas_src>
import jax
import jax.numpy as jnp
import numpy as np
from jax.experimental import pallas as pl
from jax.experimental.pallas import tpu as pltpu

# ---------------- model hyper-parameters (small, consistent with EEGNet.__init__) --------
B = 4               # demo batch (must be a multiple of PAIR)
CH = 4              # in_channel (EEG electrodes) -> height of the depthwise spatial conv
S = 64              # samples (divisible by 32 for the two avg-pools)
KERN_LEN = 8        # block-1 temporal conv length
F1 = 4
D = 2
F2 = 8
NB_CLASSES = 4
NORM_RATE = 0.25
BN_EPS = 1e-5

DF1 = D * F1        # 8
SEP_K = 16          # SeparableConv2d temporal kernel length
POOL1 = 4
POOL2 = 8
S_P1 = S // POOL1   # 16  (after AvgPool2d((1, 4)))
S_P2 = S_P1 // POOL2  # 2 (after AvgPool2d((1, 8)))

PAIR = 2            # batch elements packed side-by-side along the lane axis per grid step
LANES = PAIR * S    # 128

# PyTorch padding='same' for even kernels: left = (k-1)//2, right = (k-1) - left
PAD1_L = (KERN_LEN - 1) // 2
PAD1_R = KERN_LEN - 1 - PAD1_L
PAD2_L = (SEP_K - 1) // 2
PAD2_R = SEP_K - 1 - PAD2_L

# ---------------- packed weight-slab row offsets (block starts are 8-row aligned) --------
ROW_W1L = 0                          # 64 rows : per-tap masked temporal weights (BN1 folded)
ROW_W2 = ROW_W1L + KERN_LEN * DF1    # 128 rows: sep-depthwise + pointwise + BN3 scale
ROW_P = ROW_W2 + DF1 * S_P1          # 128 rows: AvgPool(1,4) as a matmul
ROW_WFC = ROW_P + LANES              # 128 rows: AvgPool(1,8) + flatten + constrained FC
ROW_B2 = ROW_WFC + F2 * S_P1         # 1 row   : BN3 shift per (f, t) lane
ROW_FCB = ROW_B2 + 1                 # 1 row   : FC bias
ROW_B1 = ROW_B2 + 8                  # 8 rows  : folded block-1 bias, pre-broadcast
ROW_WDW = ROW_B1 + DF1               # 8 rows  : depthwise spatial weights (BN2 folded)
TOTAL_ROWS = ROW_WDW + DF1           # 472


# =========================================================================================
# Kernel
# =========================================================================================
def _elu(v):
    return jnp.where(v > 0, v, jnp.exp(jnp.minimum(v, 0.0)) - 1.0)


def eegnet_kernel(x_ref, w_ref, out_ref):
    x = x_ref[...]                                               # (CH, LANES)

    # ---- Block 1a: depthwise spatial conv (CH,1), BN2 scale folded -> 4 VPU MACs --------
    wdw = w_ref[ROW_WDW:ROW_WDW + DF1, 0:CH]                     # (DF1, CH)
    z = wdw[:, 0:1] * x[0:1, :]
    for h in range(1, CH):
        z = z + wdw[:, h:h + 1] * x[h:h + 1, :]                  # (DF1, LANES)

    # ---- Block 1b: temporal 'same' conv (1, kern_len), BN1 scale folded -----------------
    # Per-tap weights are pre-broadcast over (channel, lane) and zero-masked where the tap
    # would read padding, so a plain circular lane roll of z is safe at batch-block edges.
    acc = w_ref[ROW_B1:ROW_B1 + DF1, :]                          # folded BN bias (DF1, LANES)
    for k in range(KERN_LEN):
        shift = PAD1_L - k
        zk = z if shift == 0 else jnp.roll(z, shift, axis=1)
        acc = acc + w_ref[ROW_W1L + k * DF1:ROW_W1L + (k + 1) * DF1, :] * zk
    y = _elu(acc)                                                # (DF1, LANES)

    # ---- AvgPool2d((1, 4)) as one depth-128 matmul (keeps pooling off the XLU) ----------
    pool1 = w_ref[ROW_P:ROW_P + LANES, 0:PAIR * S_P1]            # (LANES, 2*S_P1)
    a1 = jnp.dot(y, pool1, preferred_element_type=jnp.float32)   # (DF1, 2*S_P1)

    # ---- bridge: (DF1, pair*S_P1) -> (pair, DF1*S_P1); one tiny slice+concat relayout ---
    rows = []
    for b in range(PAIR):
        pieces = [a1[r:r + 1, b * S_P1:(b + 1) * S_P1] for r in range(DF1)]
        rows.append(jnp.concatenate(pieces, axis=1))             # (1, DF1*S_P1)
    a1b = jnp.concatenate(rows, axis=0)                          # (PAIR, DF1*S_P1)

    # ---- Block 2: SeparableConv2d (depthwise (1,16) + pointwise) + BN3, one matmul ------
    w2 = w_ref[ROW_W2:ROW_W2 + DF1 * S_P1, 0:F2 * S_P1]          # (128, 128)
    pre2 = jnp.dot(a1b, w2, preferred_element_type=jnp.float32) \
        + w_ref[ROW_B2:ROW_B2 + 1, 0:F2 * S_P1]
    a2 = _elu(pre2)                                              # (PAIR, F2*S_P1)

    # ---- AvgPool2d((1, 8)) + flatten + ConstraintLinear, folded into one matmul ---------
    wfc = w_ref[ROW_WFC:ROW_WFC + F2 * S_P1, 0:NB_CLASSES]       # (128, NB_CLASSES)
    logits = jnp.dot(a2, wfc, preferred_element_type=jnp.float32) \
        + w_ref[ROW_FCB:ROW_FCB + 1, 0:NB_CLASSES]

    # ---- Softmax(dim=1) ------------------------------------------------------------------
    m = jnp.max(logits, axis=1, keepdims=True)
    e = jnp.exp(logits - m)
    out_ref[...] = e / jnp.sum(e, axis=1, keepdims=True)


def eegnet_forward(x_nchw, weight_slab):
    """x_nchw: (B, 1, CH, S) float32, like the PyTorch module's expected input."""
    bt = x_nchw.shape[0]
    assert bt % PAIR == 0, "batch must be a multiple of PAIR (pad in glue otherwise)"
    nblk = bt // PAIR
    # lane-dense input layout: (CH, B*S), lane index = b*S + t
    x_lane = jnp.transpose(x_nchw[:, 0], (1, 0, 2)).reshape(CH, bt * S)

    out = pl.pallas_call(
        eegnet_kernel,
        out_shape=jax.ShapeDtypeStruct((nblk, PAIR, NB_CLASSES), jnp.float32),
        grid=(nblk,),
        in_specs=[
            pl.BlockSpec((CH, LANES), lambda i: (0, i)),
            pl.BlockSpec((TOTAL_ROWS, LANES), lambda i: (0, 0)),   # constant -> fetched once
        ],
        out_specs=pl.BlockSpec((None, PAIR, NB_CLASSES), lambda i: (i, 0, 0)),
        compiler_params=pltpu.CompilerParams(dimension_semantics=("parallel",)),
    )(x_lane, weight_slab)
    return out.reshape(bt, NB_CLASSES)


# =========================================================================================
# Glue: BN folding, max-norm constraints, weight packing
# =========================================================================================
def _max_norm_np(w, lim):
    """torch.renorm(w, p=2, dim=0, maxnorm=lim): clamp the L2 norm of each w[i]."""
    flat = w.reshape(w.shape[0], -1)
    n = np.sqrt(np.sum(flat * flat, axis=1, keepdims=True))
    scale = np.minimum(1.0, lim / (n + 1e-7))
    return (flat * scale).reshape(w.shape).astype(np.float32)


def _bn_scale_shift(bn):
    s = bn['gamma'] / np.sqrt(bn['var'] + BN_EPS)
    return s.astype(np.float32), (bn['beta'] - bn['mean'] * s).astype(np.float32)


def build_weight_slab(p):
    """Fold eval-mode BN + max-norm constraints into the conv/FC weights and pack everything
    the kernel needs into ONE (TOTAL_ROWS, LANES) f32 slab (single weight DMA)."""
    w1 = np.asarray(p['w1'], np.float32)
    wdw = _max_norm_np(np.asarray(p['wdw'], np.float32), 1.0)        # ConstraintConv2d
    wsd = np.asarray(p['wsd'], np.float32)
    wsp = np.asarray(p['wsp'], np.float32)
    fcw = _max_norm_np(np.asarray(p['fcw'], np.float32), NORM_RATE)   # ConstraintLinear
    fcb = np.asarray(p['fcb'], np.float32).reshape(NB_CLASSES)
    s1, sh1 = _bn_scale_shift(p['bn1'])
    s2, sh2 = _bn_scale_shift(p['bn2'])
    s3, sh3 = _bn_scale_shift(p['bn3'])

    g_of = np.arange(DF1) // D                  # group (F1 index) of each D*F1 channel
    w1f = w1 * s1[:, None]                      # BN1 scale folded into the temporal conv
    wdwf = wdw * s2[:, None]                    # BN2 scale folded into the spatial conv
    bias1 = sh1[g_of] * wdwf.sum(axis=1) + sh2  # BN1 shift propagated + BN2 shift
    wspf = wsp * s3[:, None]                    # BN3 scale folded into the pointwise conv

    slab = np.zeros((TOTAL_ROWS, LANES), np.float32)

    # per-tap temporal weights, pre-broadcast over (channel, lane) and masked so the kernel's
    # circular lane roll implements zero 'same' padding per batch block.
    t_in = np.arange(LANES) % S
    for k in range(KERN_LEN):
        off = k - PAD1_L
        valid = ((t_in + off) >= 0) & ((t_in + off) < S)
        slab[ROW_W1L + k * DF1:ROW_W1L + (k + 1) * DF1, :] = (
            w1f[g_of, k][:, None] * valid[None, :].astype(np.float32))

    # SeparableConv2d: depthwise (1,16) 'same' band + pointwise 1x1 (+ BN3 scale), one matrix
    tp = np.arange(S_P1)[:, None]
    tq = np.arange(S_P1)[None, :]
    kk = tp - tq + PAD2_L
    valid = (kk >= 0) & (kk < SEP_K)
    w2 = np.zeros((DF1 * S_P1, F2 * S_P1), np.float32)
    for gd in range(DF1):
        band = np.where(valid, wsd[gd, np.clip(kk, 0, SEP_K - 1)], 0.0)
        for f in range(F2):
            w2[gd * S_P1:(gd + 1) * S_P1, f * S_P1:(f + 1) * S_P1] = wspf[f, gd] * band
    slab[ROW_W2:ROW_W2 + DF1 * S_P1, 0:F2 * S_P1] = w2

    # AvgPool2d((1,4)) as a matmul, block-diagonal per batch element of the lane pair
    pool1 = np.zeros((LANES, PAIR * S_P1), np.float32)
    for b in range(PAIR):
        for t in range(S_P1):
            pool1[b * S + POOL1 * t:b * S + POOL1 * (t + 1), b * S_P1 + t] = 1.0 / POOL1
    slab[ROW_P:ROW_P + LANES, 0:PAIR * S_P1] = pool1

    # AvgPool2d((1,8)) + flatten (torch reshape order f*S_P2 + j) + constrained Linear
    wfc = np.zeros((F2 * S_P1, NB_CLASSES), np.float32)
    for f in range(F2):
        for j in range(S_P2):
            wfc[f * S_P1 + j * POOL2:f * S_P1 + (j + 1) * POOL2, :] = (
                fcw[:, f * S_P2 + j][None, :] / POOL2)
    slab[ROW_WFC:ROW_WFC + F2 * S_P1, 0:NB_CLASSES] = wfc

    slab[ROW_B2, 0:F2 * S_P1] = np.repeat(sh3, S_P1)      # BN3 shift per (f, t) lane
    slab[ROW_FCB, 0:NB_CLASSES] = fcb
    slab[ROW_B1:ROW_B1 + DF1, :] = bias1[:, None]         # block-1 bias, pre-broadcast
    slab[ROW_WDW:ROW_WDW + DF1, 0:CH] = wdwf
    return jnp.asarray(slab)


def init_params(key):
    ks = jax.random.split(key, 6)

    def fresh_bn(n):
        return dict(gamma=np.ones(n, np.float32), beta=np.zeros(n, np.float32),
                    mean=np.zeros(n, np.float32), var=np.ones(n, np.float32))

    return dict(
        w1=0.1 * jax.random.normal(ks[0], (F1, KERN_LEN), jnp.float32),
        wdw=0.3 * jax.random.normal(ks[1], (DF1, CH), jnp.float32),
        wsd=0.3 * jax.random.normal(ks[2], (DF1, SEP_K), jnp.float32),
        wsp=0.3 * jax.random.normal(ks[3], (F2, DF1), jnp.float32),
        fcw=0.3 * jax.random.normal(ks[4], (NB_CLASSES, F2 * S_P2), jnp.float32),
        fcb=0.05 * jax.random.normal(ks[5], (NB_CLASSES,), jnp.float32),
        bn1=fresh_bn(F1), bn2=fresh_bn(DF1), bn3=fresh_bn(F2),
    )


# =========================================================================================
# Straightforward NumPy reference (mirrors the PyTorch module in eval mode)
# =========================================================================================
def eegnet_reference(x_nchw, p):
    def elu(v):
        return np.where(v > 0, v, np.exp(np.minimum(v, 0.0)) - 1.0)

    x = np.asarray(x_nchw, np.float32)[:, 0]                     # (B, CH, S)
    bt = x.shape[0]
    w1 = np.asarray(p['w1'], np.float32)
    wdw = _max_norm_np(np.asarray(p['wdw'], np.float32), 1.0)
    wsd = np.asarray(p['wsd'], np.float32)
    wsp = np.asarray(p['wsp'], np.float32)
    fcw = _max_norm_np(np.asarray(p['fcw'], np.float32), NORM_RATE)
    fcb = np.asarray(p['fcb'], np.float32).reshape(NB_CLASSES)
    s1, sh1 = _bn_scale_shift(p['bn1'])
    s2, sh2 = _bn_scale_shift(p['bn2'])
    s3, sh3 = _bn_scale_shift(p['bn3'])

    xp = np.pad(x, ((0, 0), (0, 0), (PAD1_L, PAD1_R)))
    y1 = np.zeros((bt, F1, CH, S), np.float32)
    for f in range(F1):
        for k in range(KERN_LEN):
            y1[:, f] += w1[f, k] * xp[:, :, k:k + S]
    y1 = y1 * s1[None, :, None, None] + sh1[None, :, None, None]

    y2 = np.zeros((bt, DF1, S), np.float32)
    for gd in range(DF1):
        y2[:, gd] = np.einsum('h,bht->bt', wdw[gd], y1[:, gd // D])
    y2 = y2 * s2[None, :, None] + sh2[None, :, None]
    y2 = elu(y2).reshape(bt, DF1, S_P1, POOL1).mean(-1)

    y2p = np.pad(y2, ((0, 0), (0, 0), (PAD2_L, PAD2_R)))
    y3 = np.zeros((bt, DF1, S_P1), np.float32)
    for gd in range(DF1):
        for k in range(SEP_K):
            y3[:, gd] += wsd[gd, k] * y2p[:, gd, k:k + S_P1]
    y4 = np.einsum('fc,bct->bft', wsp, y3)
    y4 = y4 * s3[None, :, None] + sh3[None, :, None]
    y4 = elu(y4).reshape(bt, F2, S_P2, POOL2).mean(-1)

    logits = y4.reshape(bt, -1) @ fcw.T + fcb[None, :]
    logits -= logits.max(axis=1, keepdims=True)
    e = np.exp(logits)
    return e / e.sum(axis=1, keepdims=True)


if __name__ == "__main__":
    key = jax.random.PRNGKey(0)
    k_x, k_p = jax.random.split(key)
    x = jax.random.normal(k_x, (B, 1, CH, S), jnp.float32)       # (BS, 1, CH, Samples)
    params = init_params(k_p)
    slab = build_weight_slab(params)

    out = jax.block_until_ready(eegnet_forward(x, slab))

    assert out.shape == (B, NB_CLASSES)
    out_np = np.asarray(out)
    assert np.all(np.isfinite(out_np))
    assert np.allclose(out_np.sum(axis=1), 1.0, atol=1e-5)       # softmax rows sum to 1
    ref = eegnet_reference(x, params)
    assert np.allclose(out_np, ref, atol=1e-4, rtol=1e-3), float(np.abs(out_np - ref).max())
    print("KERNEL_OK")
</pallas_src>

<mosaic_0001>
module attributes {stable_mosaic.version = 11 : i64} {
  func.func @eegnet_kernel(%arg0: i32, %arg1: memref<4x128xf32, #tpu.memory_space<vmem>>, %arg2: memref<472x128xf32, #tpu.memory_space<vmem>>, %arg3: memref<1x2x4xf32, #tpu.memory_space<vmem>>) attributes {dimension_semantics = [#tpu.dimension_semantics<parallel>], iteration_bounds = array<i64: 2>, scalar_prefetch = 0 : i64, scratch_operands = 0 : i64, tpu.core_type = #tpu.core_type<tc>, window_params = [{transform_indices = @transform_0, window_bounds = array<i64: 4, 128>}, {pipeline_mode = #tpu.pipeline_mode<synchronous>, transform_indices = @transform_1, window_bounds = array<i64: 472, 128>}, {transform_indices = @transform_2, window_bounds = array<i64: 1, 2, 4>}]} {
    %c0 = arith.constant 0 : index
    %c0_0 = arith.constant 0 : index
    %0 = vector.load %arg1[%c0, %c0_0] : memref<4x128xf32, #tpu.memory_space<vmem>>, vector<4x128xf32>
    %c464 = arith.constant 464 : index
    %c0_1 = arith.constant 0 : index
    %1 = vector.load %arg2[%c464, %c0_1] : memref<472x128xf32, #tpu.memory_space<vmem>>, vector<8x4xf32>
    %2 = vector.extract_strided_slice %1 {offsets = [0, 0], sizes = [8, 1], strides = [1, 1]} : vector<8x4xf32> to vector<8x1xf32>
    %3 = vector.extract_strided_slice %0 {offsets = [0, 0], sizes = [1, 128], strides = [1, 1]} : vector<4x128xf32> to vector<1x128xf32>
    %4 = vector.broadcast %2 : vector<8x1xf32> to vector<8x128xf32>
    %5 = vector.broadcast %3 : vector<1x128xf32> to vector<8x128xf32>
    %6 = arith.mulf %4, %5 : vector<8x128xf32>
    %7 = vector.extract_strided_slice %1 {offsets = [0, 1], sizes = [8, 1], strides = [1, 1]} : vector<8x4xf32> to vector<8x1xf32>
    %8 = vector.extract_strided_slice %0 {offsets = [1, 0], sizes = [1, 128], strides = [1, 1]} : vector<4x128xf32> to vector<1x128xf32>
    %9 = vector.broadcast %7 : vector<8x1xf32> to vector<8x128xf32>
    %10 = vector.broadcast %8 : vector<1x128xf32> to vector<8x128xf32>
    %11 = arith.mulf %9, %10 : vector<8x128xf32>
    %12 = arith.addf %6, %11 : vector<8x128xf32>
    %13 = vector.extract_strided_slice %1 {offsets = [0, 2], sizes = [8, 1], strides = [1, 1]} : vector<8x4xf32> to vector<8x1xf32>
    %14 = vector.extract_strided_slice %0 {offsets = [2, 0], sizes = [1, 128], strides = [1, 1]} : vector<4x128xf32> to vector<1x128xf32>
    %15 = vector.broadcast %13 : vector<8x1xf32> to vector<8x128xf32>
    %16 = vector.broadcast %14 : vector<1x128xf32> to vector<8x128xf32>
    %17 = arith.mulf %15, %16 : vector<8x128xf32>
    %18 = arith.addf %12, %17 : vector<8x128xf32>
    %19 = vector.extract_strided_slice %1 {offsets = [0, 3], sizes = [8, 1], strides = [1, 1]} : vector<8x4xf32> to vector<8x1xf32>
    %20 = vector.extract_strided_slice %0 {offsets = [3, 0], sizes = [1, 128], strides = [1, 1]} : vector<4x128xf32> to vector<1x128xf32>
    %21 = vector.broadcast %19 : vector<8x1xf32> to vector<8x128xf32>
    %22 = vector.broadcast %20 : vector<1x128xf32> to vector<8x128xf32>
    %23 = arith.mulf %21, %22 : vector<8x128xf32>
    %24 = arith.addf %18, %23 : vector<8x128xf32>
    %c456 = arith.constant 456 : index
    %c0_2 = arith.constant 0 : index
    %25 = vector.load %arg2[%c456, %c0_2] : memref<472x128xf32, #tpu.memory_space<vmem>>, vector<8x128xf32>
    %26 = vector.extract_strided_slice %24 {offsets = [0, 125], sizes = [8, 3], strides = [1, 1]} : vector<8x128xf32> to vector<8x3xf32>
    %27 = vector.extract_strided_slice %24 {offsets = [0, 0], sizes = [8, 125], strides = [1, 1]} : vector<8x128xf32> to vector<8x125xf32>
    %28 = tpu.concatenate %26, %27 in 1 : vector<8x3xf32>, vector<8x125xf32> -> vector<8x128xf32>
    %c0_3 = arith.constant 0 : index
    %c0_4 = arith.constant 0 : index
    %29 = vector.load %arg2[%c0_3, %c0_4] : memref<472x128xf32, #tpu.memory_space<vmem>>, vector<8x128xf32>
    %30 = arith.mulf %29, %28 : vector<8x128xf32>
    %31 = arith.addf %25, %30 : vector<8x128xf32>
    %32 = vector.extract_strided_slice %24 {offsets = [0, 126], sizes = [8, 2], strides = [1, 1]} : vector<8x128xf32> to vector<8x2xf32>
    %33 = vector.extract_strided_slice %24 {offsets = [0, 0], sizes = [8, 126], strides = [1, 1]} : vector<8x128xf32> to vector<8x126xf32>
    %34 = tpu.concatenate %32, %33 in 1 : vector<8x2xf32>, vector<8x126xf32> -> vector<8x128xf32>
    %c8 = arith.constant 8 : index
    %c0_5 = arith.constant 0 : index
    %35 = vector.load %arg2[%c8, %c0_5] : memref<472x128xf32, #tpu.memory_space<vmem>>, vector<8x128xf32>
    %36 = arith.mulf %35, %34 : vector<8x128xf32>
    %37 = arith.addf %31, %36 : vector<8x128xf32>
    %38 = vector.extract_strided_slice %24 {offsets = [0, 127], sizes = [8, 1], strides = [1, 1]} : vector<8x128xf32> to vector<8x1xf32>
    %39 = vector.extract_strided_slice %24 {offsets = [0, 0], sizes = [8, 127], strides = [1, 1]} : vector<8x128xf32> to vector<8x127xf32>
    %40 = tpu.concatenate %38, %39 in 1 : vector<8x1xf32>, vector<8x127xf32> -> vector<8x128xf32>
    %c16 = arith.constant 16 : index
    %c0_6 = arith.constant 0 : index
    %41 = vector.load %arg2[%c16, %c0_6] : memref<472x128xf32, #tpu.memory_space<vmem>>, vector<8x128xf32>
    %42 = arith.mulf %41, %40 : vector<8x128xf32>
    %43 = arith.addf %37, %42 : vector<8x128xf32>
    %c24 = arith.constant 24 : index
    %c0_7 = arith.constant 0 : index
    %44 = vector.load %arg2[%c24, %c0_7] : memref<472x128xf32, #tpu.memory_space<vmem>>, vector<8x128xf32>
    %45 = arith.mulf %44, %24 : vector<8x128xf32>
    %46 = arith.addf %43, %45 : vector<8x128xf32>
    %47 = vector.extract_strided_slice %24 {offsets = [0, 1], sizes = [8, 127], strides = [1, 1]} : vector<8x128xf32> to vector<8x127xf32>
    %48 = vector.extract_strided_slice %24 {offsets = [0, 0], sizes = [8, 1], strides = [1, 1]} : vector<8x128xf32> to vector<8x1xf32>
    %49 = tpu.concatenate %47, %48 in 1 : vector<8x127xf32>, vector<8x1xf32> -> vector<8x128xf32>
    %c32 = arith.constant 32 : index
    %c0_8 = arith.constant 0 : index
    %50 = vector.load %arg2[%c32, %c0_8] : memref<472x128xf32, #tpu.memory_space<vmem>>, vector<8x128xf32>
    %51 = arith.mulf %50, %49 : vector<8x128xf32>
    %52 = arith.addf %46, %51 : vector<8x128xf32>
    %53 = vector.extract_strided_slice %24 {offsets = [0, 2], sizes = [8, 126], strides = [1, 1]} : vector<8x128xf32> to vector<8x126xf32>
    %54 = vector.extract_strided_slice %24 {offsets = [0, 0], sizes = [8, 2], strides = [1, 1]} : vector<8x128xf32> to vector<8x2xf32>
    %55 = tpu.concatenate %53, %54 in 1 : vector<8x126xf32>, vector<8x2xf32> -> vector<8x128xf32>
    %c40 = arith.constant 40 : index
    %c0_9 = arith.constant 0 : index
    %56 = vector.load %arg2[%c40, %c0_9] : memref<472x128xf32, #tpu.memory_space<vmem>>, vector<8x128xf32>
    %57 = arith.mulf %56, %55 : vector<8x128xf32>
    %58 = arith.addf %52, %57 : vector<8x128xf32>
    %59 = vector.extract_strided_slice %24 {offsets = [0, 3], sizes = [8, 125], strides = [1, 1]} : vector<8x128xf32> to vector<8x125xf32>
    %60 = vector.extract_strided_slice %24 {offsets = [0, 0], sizes = [8, 3], strides = [1, 1]} : vector<8x128xf32> to vector<8x3xf32>
    %61 = tpu.concatenate %59, %60 in 1 : vector<8x125xf32>, vector<8x3xf32> -> vector<8x128xf32>
    %c48 = arith.constant 48 : index
    %c0_10 = arith.constant 0 : index
    %62 = vector.load %arg2[%c48, %c0_10] : memref<472x128xf32, #tpu.memory_space<vmem>>, vector<8x128xf32>
    %63 = arith.mulf %62, %61 : vector<8x128xf32>
    %64 = arith.addf %58, %63 : vector<8x128xf32>
    %65 = vector.extract_strided_slice %24 {offsets = [0, 4], sizes = [8, 124], strides = [1, 1]} : vector<8x128xf32> to vector<8x124xf32>
    %66 = vector.extract_strided_slice %24 {offsets = [0, 0], sizes = [8, 4], strides = [1, 1]} : vector<8x128xf32> to vector<8x4xf32>
    %67 = tpu.concatenate %65, %66 in 1 : vector<8x124xf32>, vector<8x4xf32> -> vector<8x128xf32>
    %c56 = arith.constant 56 : index
    %c0_11 = arith.constant 0 : index
    %68 = vector.load %arg2[%c56, %c0_11] : memref<472x128xf32, #tpu.memory_space<vmem>>, vector<8x128xf32>
    %69 = arith.mulf %68, %67 : vector<8x128xf32>
    %70 = arith.addf %64, %69 : vector<8x128xf32>
    %cst = arith.constant 0.000000e+00 : f32
    %71 = vector.broadcast %cst : f32 to vector<8x128xf32>
    %72 = arith.cmpf ogt, %70, %71 : vector<8x128xf32>
    %cst_12 = arith.constant 0.000000e+00 : f32
    %73 = vector.broadcast %cst_12 : f32 to vector<8x128xf32>
    %74 = arith.minimumf %70, %73 : vector<8x128xf32>
    %75 = math.exp %74 : vector<8x128xf32>
    %cst_13 = arith.constant 1.000000e+00 : f32
    %76 = vector.broadcast %cst_13 : f32 to vector<8x128xf32>
    %77 = arith.subf %75, %76 : vector<8x128xf32>
    %78 = arith.select %72, %70, %77 : vector<8x128xi1>, vector<8x128xf32>
    %c192 = arith.constant 192 : index
    %c0_14 = arith.constant 0 : index
    %79 = vector.load %arg2[%c192, %c0_14] : memref<472x128xf32, #tpu.memory_space<vmem>>, vector<128x32xf32>
    %cst_15 = arith.constant dense<0.000000e+00> : vector<8x32xf32>
    %80 = tpu.matmul %78, %79, %cst_15 {dimension_numbers = #tpu.dot_dimension_numbers<[1], [0], [0], [1], [0, 0, 1, 1], [], []>} : vector<8x128xf32>, vector<128x32xf32>, vector<8x32xf32> -> vector<8x32xf32>
    %81 = vector.extract_strided_slice %80 {offsets = [0, 0], sizes = [1, 16], strides = [1, 1]} : vector<8x32xf32> to vector<1x16xf32>
    %82 = vector.extract_strided_slice %80 {offsets = [1, 0], sizes = [1, 16], strides = [1, 1]} : vector<8x32xf32> to vector<1x16xf32>
    %83 = vector.extract_strided_slice %80 {offsets = [2, 0], sizes = [1, 16], strides = [1, 1]} : vector<8x32xf32> to vector<1x16xf32>
    %84 = vector.extract_strided_slice %80 {offsets = [3, 0], sizes = [1, 16], strides = [1, 1]} : vector<8x32xf32> to vector<1x16xf32>
    %85 = vector.extract_strided_slice %80 {offsets = [4, 0], sizes = [1, 16], strides = [1, 1]} : vector<8x32xf32> to vector<1x16xf32>
    %86 = vector.extract_strided_slice %80 {offsets = [5, 0], sizes = [1, 16], strides = [1, 1]} : vector<8x32xf32> to vector<1x16xf32>
    %87 = vector.extract_strided_slice %80 {offsets = [6, 0], sizes = [1, 16], strides = [1, 1]} : vector<8x32xf32> to vector<1x16xf32>
    %88 = vector.extract_strided_slice %80 {offsets = [7, 0], sizes = [1, 16], strides = [1, 1]} : vector<8x32xf32> to vector<1x16xf32>
    %89 = tpu.concatenate %81, %82, %83, %84, %85, %86, %87, %88 in 1 : vector<1x16xf32>, vector<1x16xf32>, vector<1x16xf32>, vector<1x16xf32>, vector<1x16xf32>, vector<1x16xf32>, vector<1x16xf32>, vector<1x16xf32> -> vector<1x128xf32>
    %90 = vector.extract_strided_slice %80 {offsets = [0, 16], sizes = [1, 16], strides = [1, 1]} : vector<8x32xf32> to vector<1x16xf32>
    %91 = vector.extract_strided_slice %80 {offsets = [1, 16], sizes = [1, 16], strides = [1, 1]} : vector<8x32xf32> to vector<1x16xf32>
    %92 = vector.extract_strided_slice %80 {offsets = [2, 16], sizes = [1, 16], strides = [1, 1]} : vector<8x32xf32> to vector<1x16xf32>
    %93 = vector.extract_strided_slice %80 {offsets = [3, 16], sizes = [1, 16], strides = [1, 1]} : vector<8x32xf32> to vector<1x16xf32>
    %94 = vector.extract_strided_slice %80 {offsets = [4, 16], sizes = [1, 16], strides = [1, 1]} : vector<8x32xf32> to vector<1x16xf32>
    %95 = vector.extract_strided_slice %80 {offsets = [5, 16], sizes = [1, 16], strides = [1, 1]} : vector<8x32xf32> to vector<1x16xf32>
    %96 = vector.extract_strided_slice %80 {offsets = [6, 16], sizes = [1, 16], strides = [1, 1]} : vector<8x32xf32> to vector<1x16xf32>
    %97 = vector.extract_strided_slice %80 {offsets = [7, 16], sizes = [1, 16], strides = [1, 1]} : vector<8x32xf32> to vector<1x16xf32>
    %98 = tpu.concatenate %90, %91, %92, %93, %94, %95, %96, %97 in 1 : vector<1x16xf32>, vector<1x16xf32>, vector<1x16xf32>, vector<1x16xf32>, vector<1x16xf32>, vector<1x16xf32>, vector<1x16xf32>, vector<1x16xf32> -> vector<1x128xf32>
    %99 = tpu.concatenate %89, %98 in 0 : vector<1x128xf32>, vector<1x128xf32> -> vector<2x128xf32>
    %c64 = arith.constant 64 : index
    %c0_16 = arith.constant 0 : index
    %100 = vector.load %arg2[%c64, %c0_16] : memref<472x128xf32, #tpu.memory_space<vmem>>, vector<128x128xf32>
    %cst_17 = arith.constant dense<0.000000e+00> : vector<2x128xf32>
    %101 = tpu.matmul %99, %100, %cst_17 {dimension_numbers = #tpu.dot_dimension_numbers<[1], [0], [0], [1], [0, 0, 1, 1], [], []>} : vector<2x128xf32>, vector<128x128xf32>, vector<2x128xf32> -> vector<2x128xf32>
    %c448 = arith.constant 448 : index
    %c0_18 = arith.constant 0 : index
    %102 = vector.load %arg2[%c448, %c0_18] : memref<472x128xf32, #tpu.memory_space<vmem>>, vector<1x128xf32>
    %103 = vector.broadcast %102 : vector<1x128xf32> to vector<2x128xf32>
    %104 = arith.addf %101, %103 : vector<2x128xf32>
    %cst_19 = arith.constant 0.000000e+00 : f32
    %105 = vector.broadcast %cst_19 : f32 to vector<2x128xf32>
    %106 = arith.cmpf ogt, %104, %105 : vector<2x128xf32>
    %cst_20 = arith.constant 0.000000e+00 : f32
    %107 = vector.broadcast %cst_20 : f32 to vector<2x128xf32>
    %108 = arith.minimumf %104, %107 : vector<2x128xf32>
    %109 = math.exp %108 : vector<2x128xf32>
    %cst_21 = arith.constant 1.000000e+00 : f32
    %110 = vector.broadcast %cst_21 : f32 to vector<2x128xf32>
    %111 = arith.subf %109, %110 : vector<2x128xf32>
    %112 = arith.select %106, %104, %111 : vector<2x128xi1>, vector<2x128xf32>
    %c320 = arith.constant 320 : index
    %c0_22 = arith.constant 0 : index
    %113 = vector.load %arg2[%c320, %c0_22] : memref<472x128xf32, #tpu.memory_space<vmem>>, vector<128x4xf32>
    %cst_23 = arith.constant dense<0.000000e+00> : vector<2x4xf32>
    %114 = tpu.matmul %112, %113, %cst_23 {dimension_numbers = #tpu.dot_dimension_numbers<[1], [0], [0], [1], [0, 0, 1, 1], [], []>} : vector<2x128xf32>, vector<128x4xf32>, vector<2x4xf32> -> vector<2x4xf32>
    %c449 = arith.constant 449 : index
    %c0_24 = arith.constant 0 : index
    %115 = vector.load %arg2[%c449, %c0_24] : memref<472x128xf32, #tpu.memory_space<vmem>>, vector<1x4xf32>
    %116 = vector.broadcast %115 : vector<1x4xf32> to vector<2x4xf32>
    %117 = arith.addf %114, %116 : vector<2x4xf32>
    %cst_25 = arith.constant dense<0xFF800000> : vector<2xf32>
    %118 = vector.multi_reduction <maximumf>, %117, %cst_25 [1] : vector<2x4xf32> to vector<2xf32>
    %119 = vector.shape_cast %118 : vector<2xf32> to vector<2x1xf32>
    %120 = vector.broadcast %119 : vector<2x1xf32> to vector<2x4xf32>
    %121 = arith.subf %117, %120 : vector<2x4xf32>
    %122 = math.exp %121 : vector<2x4xf32>
    %cst_26 = arith.constant dense<0.000000e+00> : vector<2xf32>
    %123 = vector.multi_reduction <add>, %122, %cst_26 [1] : vector<2x4xf32> to vector<2xf32>
    %124 = vector.shape_cast %123 : vector<2xf32> to vector<2x1xf32>
    %125 = vector.broadcast %124 : vector<2x1xf32> to vector<2x4xf32>
    %126 = arith.divf %122, %125 : vector<2x4xf32>
    %c0_27 = arith.constant 0 : index
    %c0_28 = arith.constant 0 : index
    %c0_29 = arith.constant 0 : index
    %127 = vector.load %arg3[%c0_27, %c0_28, %c0_29] : memref<1x2x4xf32, #tpu.memory_space<vmem>>, vector<1x2x4xf32>
    %128 = vector.shape_cast %127 : vector<1x2x4xf32> to vector<2x4xf32>
    %129 = vector.shape_cast %126 : vector<2x4xf32> to vector<1x2x4xf32>
    tpu.vector_store %arg3[%c0_27, %c0_28, %c0_29], %129 {strides = array<i32>} : memref<1x2x4xf32, #tpu.memory_space<vmem>>, vector<1x2x4xf32>,
    return
  }
  func.func @transform_0(%arg0: i32) -> (i32, i32) {
    %c0_i32 = arith.constant 0 : i32
    %c0_i32_0 = arith.constant 0 : i32
    return %c0_i32, %arg0 : i32, i32
  }
  func.func @transform_1(%arg0: i32) -> (i32, i32) {
    %c0_i32 = arith.constant 0 : i32
    %c0_i32_0 = arith.constant 0 : i32
    %c0_i32_1 = arith.constant 0 : i32
    return %c0_i32, %c0_i32_0 : i32, i32
  }
  func.func @transform_2(%arg0: i32) -> (i32, i32, i32) {
    %c0_i32 = arith.constant 0 : i32
    %c0_i32_0 = arith.constant 0 : i32
    %c0_i32_1 = arith.constant 0 : i32
    return %arg0, %c0_i32, %c0_i32_0 : i32, i32, i32
  }
}

</mosaic_0001>

<llo_original>
// kernel: tpu_custom_call.1
$region0: #{tpu_custom_call.1}
  #allocation0 [shape = 'u32[]', space=smem, size = 0x4, offset = 0x4, fixed_abs, tag = 'smem constant byte address 0x4 - core index']
  #allocation1 [shape = 'u32[144,128]{1,0:T(1,128)}', space=vmem, size = 0x12000, scoped, tag = 'internal scratch']
  %s0 = inlined_call_operand.hbm [shape: f32[4,256], index: 0, kind: input, shape index: {}]
  %s1 = inlined_call_operand.hbm [shape: f32[472,128], index: 1, kind: input, shape index: {}]
  %s2 = inlined_call_operand.hbm [shape: f32[2,2,4], index: 2, kind: output, shape index: {}]
  %s3 = sld [smem:[#allocation0]]
  $region49: #{tpu_custom_call.1} parent=0
    _
  %s5 = ssub.s32 1, %s3
  %s6 = scalar_select 0, %s5, %s3
  $region1: #{tpu_custom_call.1} parent=0
    #allocation2 [shape = 'u8[4096]{0}', space=vmem, size = 0x1000, scoped, tag = 'input window, operand 0']
    #allocation3 [shape = 's32[2]{0}', space=sflag, size = 0x8, scoped, tag = 'scoped memory for tpu_custom_call.1']
    #allocation4 [shape = 's32[2]{0}', space=sflag, size = 0x8, scoped, tag = 'scoped memory for tpu_custom_call.1']
    #allocation5 [shape = 'u8[241664]{0}', space=vmem, size = 0x3b000, scoped, tag = 'input window, operand 1, single buffered']
    #allocation6 [shape = 's32[1]{0}', space=sflag, size = 0x4, scoped, tag = 'scoped memory for tpu_custom_call.1']
    #allocation7 [shape = 'u8[2048]{0}', space=vmem, size = 0x800, scoped, tag = 'output window, operand 0']
    %7 = vsyncpa [#allocation3], 0
    %s8 = scalar_lea.sflag [#allocation3], 1
    %9 = vsyncpa %s8, 0
    %10 = vsyncpa [#allocation6], 0
    %11 = vsyncpa [#allocation4], 0
    %s12 = scalar_lea.sflag [#allocation4], 1
    %13 = vsyncpa %s12, 0
    loop: start=0, step=1, limit=4
    $region2: #{tpu_custom_call.1} parent=1 // loop_pre_header
      _
    $region3: #{tpu_custom_call.1} parent=1 // loop_header
      %s15 = sphi 0, %s19
      %p16 = scmp.ge.s32.totalorder %s15, 4
      %s25 = sphi 0, %s27
      %s28 = sphi 0, %s25
      %s29 = sphi 0, %s28
      %s45 = sphi 0, %s29
      %s49 = sphi 0, %s49
      %s51 = sphi 0, %s49
      %s52 = sphi 0, %s51
      %s66 = sphi 0, %s52
      %s72 = sphi 0, %s74
      %s75 = sphi 0, %s72
      %s76 = sphi 0, %s75
      %s92 = sphi 0, %s76
    $region4: #{tpu_custom_call.1} parent=1 // loop_header_branch
      %18 = sbr.rel (%p16) target = $region8
    $region5: #{tpu_custom_call.1} parent=1 // loop_body
      %s20 = ssub.s32 %s15, 1
      %s21 = ssub.s32 %s15, 2
      %s22 = sadd.s32 %s15, 1
      %s23 = ssub.s32 %s15, %s22
      %p24 = scmp.eq.s32.totalorder %s23, 0
      %s26 = sadd.s32 %s25, 1
      %s27 = scalar_select %p24, %s25, %s26
      %p30 = pneg %p24
      %p31 = scmp.eq.s32.totalorder %s15, 1
      %p32 = por %p30, %p31
      %p33 = scmp.ne.s32.totalorder %s25, %s28
      %p34 = scmp.eq.s32.totalorder %s15, 0
      %p35 = por %p33, %p34
      %p36 = scmp.ne.s32.totalorder %s25, %s28
      %p37 = scmp.eq.s32.totalorder %s20, 1
      %p38 = por %p36, %p37
      %p39 = scmp.ne.s32.totalorder %s28, %s29
      %p40 = scmp.eq.s32.totalorder %s20, 0
      %p41 = por %p39, %p40
      %p42 = scmp.ne.s32.totalorder %s28, %s29
      %p43 = scmp.eq.s32.totalorder %s21, 1
      %p44 = por %p42, %p43
      %p46 = scmp.ne.s32.totalorder %s29, %s45
      %p47 = scmp.eq.s32.totalorder %s21, 0
      %p48 = por %p46, %p47
      %s50 = sadd.s32 %s49, 1
      %p53 = scmp.eq.s32.totalorder %s15, 1
      %p54 = scmp.ne.s32.totalorder %s49, %s51
      %p55 = scmp.eq.s32.totalorder %s15, 0
      %p56 = por %p54, %p55
      %p57 = scmp.ne.s32.totalorder %s49, %s51
      %p58 = scmp.eq.s32.totalorder %s20, 1
      %p59 = por %p57, %p58
      %p60 = scmp.ne.s32.totalorder %s51, %s52
      %p61 = scmp.eq.s32.totalorder %s20, 0
      %p62 = por %p60, %p61
      %p63 = scmp.ne.s32.totalorder %s51, %s52
      %p64 = scmp.eq.s32.totalorder %s21, 1
      %p65 = por %p63, %p64
      %p67 = scmp.ne.s32.totalorder %s52, %s66
      %p68 = scmp.eq.s32.totalorder %s21, 0
      %p69 = por %p67, %p68
      %s70 = ssub.s32 %s15, %s22
      %p71 = scmp.eq.s32.totalorder %s70, 0
      %s73 = sadd.s32 %s72, 1
      %s74 = scalar_select %p71, %s72, %s73
      %p77 = pneg %p71
      %p78 = scmp.eq.s32.totalorder %s15, 1
      %p79 = por %p77, %p78
      %p80 = scmp.ne.s32.totalorder %s72, %s75
      %p81 = scmp.eq.s32.totalorder %s15, 0
      %p82 = por %p80, %p81
      %p83 = scmp.ne.s32.totalorder %s72, %s75
      %p84 = scmp.eq.s32.totalorder %s20, 1
      %p85 = por %p83, %p84
      %p86 = scmp.ne.s32.totalorder %s75, %s76
      %p87 = scmp.eq.s32.totalorder %s20, 0
      %p88 = por %p86, %p87
      %p89 = scmp.ne.s32.totalorder %s75, %s76
      %p90 = scmp.eq.s32.totalorder %s21, 1
      %p91 = por %p89, %p90
      %p93 = scmp.ne.s32.totalorder %s76, %s92
      %p94 = scmp.eq.s32.totalorder %s21, 0
      %p95 = por %p93, %p94
      %p96 = scmp.le.s32.totalorder 1, %s15
      %p97 = scmp.lt.s32.totalorder %s15, 3
      %p98 = pnand %p96, %p97
      %p99 = pneg %p98
      // Predicated region
      $region9: #{tpu_custom_call.1} parent=5 // pred_check
        _
      $region10: #{tpu_custom_call.1} parent=5 // pred_check_branch
        %101 = sbr.rel (%p98) target = $region12
      $region11: #{tpu_custom_call.1} parent=5 // pred_region
        %s102 = ssub.s32 %s15, 1
        // Predicated region
        $region13: #{tpu_custom_call.1} parent=11 // pred_check
          %p103 = pneg %p62
        $region14: #{tpu_custom_call.1} parent=11 // pred_check_branch
          %105 = sbr.rel (%p103) target = $region16
        $region15: #{tpu_custom_call.1} parent=11 // pred_region
          %s107 = ssub.s32 7552, 7552
          %108 = vsyncadd [#allocation6], %s107
          %s109 = sshll.u32 [#allocation5], 4
          %s110 = int_to_ptr.vmem [resolvable:$true] %s109
          %115 = dma.hbm_to_vmem [thread:$0]  %s1, 7552, %s110, [#allocation6], 128, 128, 8
        $region16: #{tpu_custom_call.1} parent=11 // pred_fallthru
          _
      $region12: #{tpu_custom_call.1} parent=5 // pred_fallthru
        _
      %p116 = scmp.lt.s32.totalorder %s15, 2
      // Predicated region
      $region17: #{tpu_custom_call.1} parent=5 // pred_check
        %p117 = pneg %p116
      $region18: #{tpu_custom_call.1} parent=5 // pred_check_branch
        %119 = sbr.rel (%p117) target = $region20
      $region19: #{tpu_custom_call.1} parent=5 // pred_region
        // Predicated region
        $region21: #{tpu_custom_call.1} parent=19 // pred_check
          %p120 = pneg %p35
        $region22: #{tpu_custom_call.1} parent=19 // pred_check_branch
          %122 = sbr.rel (%p120) target = $region24
        $region23: #{tpu_custom_call.1} parent=19 // pred_region
          %s123 = sand.u32 %s25, 1
          %s124 = scalar_lea.sflag [#allocation3], %s123
          %s125 = sand.u32 %s25, 1
          %s126 = smul.addr %s125, 4
          %s127 = scalar_lea.vmem [#allocation2], %s126
          %s129 = ssub.s32 64, 64
          %130 = vsyncadd %s124, %s129
          %s131 = smul.addr %s15, 64
          %s132 = scalar_lea.hbm %s0, %s131
          %s134 = sshll.u32 %s127, 4
          %s135 = int_to_ptr.vmem [resolvable:$true] %s134
          %137 = dma.hbm_to_vmem [thread:$0]  %s132, 64, %s135, %s124
        $region24: #{tpu_custom_call.1} parent=19 // pred_fallthru
          _
      $region20: #{tpu_custom_call.1} parent=5 // pred_fallthru
        _
      %p138 = scmp.le.s32.totalorder 1, %s15
      %p139 = scmp.lt.s32.totalorder %s15, 3
      %p140 = pnand %p138, %p139
      %p141 = pneg %p140
      // Predicated region
      $region25: #{tpu_custom_call.1} parent=5 // pred_check
        _
      $region26: #{tpu_custom_call.1} parent=5 // pred_check_branch
        %143 = sbr.rel (%p140) target = $region28
      $region27: #{tpu_custom_call.1} parent=5 // pred_region
        %s144 = ssub.s32 %s15, 1
        %s145 = sand.u32 %s28, 1
        %s146 = scalar_lea.sflag [#allocation3], %s145
        %s147 = sand.u32 %s28, 1
        %s148 = smul.addr %s147, 4
        %s149 = scalar_lea.vmem [#allocation2], %s148
        // Predicated region
        $region29: #{tpu_custom_call.1} parent=27 // pred_check
          %p150 = pneg %p41
        $region30: #{tpu_custom_call.1} parent=27 // pred_check_branch
          %152 = sbr.rel (%p150) target = $region32
        $region31: #{tpu_custom_call.1} parent=27 // pred_region
          %153 = dma.done %s146, 64
        $region32: #{tpu_custom_call.1} parent=27 // pred_fallthru
          _
        // Predicated region
        $region33: #{tpu_custom_call.1} parent=27 // pred_check
          %p154 = pneg %p62
        $region34: #{tpu_custom_call.1} parent=27 // pred_check_branch
          %156 = sbr.rel (%p154) target = $region36
        $region35: #{tpu_custom_call.1} parent=27 // pred_region
          %157 = dma.done [#allocation6], 7552
        $region36: #{tpu_custom_call.1} parent=27 // pred_fallthru
          _
        %s158 = sand.u32 %s28, 1
        %s159 = scalar_lea.sflag [#allocation3], %s158
        %s160 = sand.u32 %s28, 1
        %s161 = smul.addr %s160, 4
        %s162 = scalar_lea.vmem [#allocation2], %s161
        %p163 = pneg %p41
        %p164 = pneg %p38
        %p165 = pneg %p62
        %p166 = pneg %p59
        %p167 = pneg %p88
        %p168 = pneg %p85
        %s169 = sand.u32 %s75, 1
        %s170 = scalar_lea.sflag [#allocation4], %s169
        %s171 = sand.u32 %s75, 1
        %s172 = smul.addr %s171, 2
        %s173 = scalar_lea.vmem [#allocation7], %s172
        %v174 = vld [vmem:[%s149] sm:$0xf]
        %v175 = vld [vmem:[#allocation5 + $0x1d0] sm:$0xff]
        %177 = vset.pattern.permute.xlu0 0
        %178 = vperm.xlu0 %177, %v175
        %v179 = vpop.permute.xlu0 %178
        %v181 = vlaneseq
        %v182 = vshrl.u32 %v181, 7
        %v183 = vsub.s32 0, %v182
        %v184 = vrot.slane %v174, %v183
        %v185 = vmul.f32 %v179, %v184
        %186 = vset.pattern.permute.xlu0 1
        %187 = vperm.xlu0 %186, %v175
        %v188 = vpop.permute.xlu0 %187
        %v190 = vlaneseq
        %v191 = vshrl.u32 %v190, 7
        %v192 = vsub.s32 1, %v191
        %v193 = vrot.slane %v174, %v192
        %v194 = vmul.f32 %v188, %v193
        %v195 = vadd.f32 %v185, %v194
        %196 = vset.pattern.permute.xlu0 2
        %197 = vperm.xlu0 %196, %v175
        %v198 = vpop.permute.xlu0 %197
        %v200 = vlaneseq
        %v201 = vshrl.u32 %v200, 7
        %v202 = vsub.s32 2, %v201
        %v203 = vrot.slane %v174, %v202
        %v204 = vmul.f32 %v198, %v203
        %v205 = vadd.f32 %v195, %v204
        %206 = vset.pattern.permute.xlu0 3
        %207 = vperm.xlu0 %206, %v175
        %v208 = vpop.permute.xlu0 %207
        %v210 = vlaneseq
        %v211 = vshrl.u32 %v210, 7
        %v212 = vsub.s32 3, %v211
        %v213 = vrot.slane %v174, %v212
        %v214 = vmul.f32 %v208, %v213
        %v215 = vadd.f32 %v205, %v214
        %v216 = vld [vmem:[#allocation5 + $0x1c8] sm:$0xff]
        %218 = vrot.lane.b32.xlu0 %v215, 3
        %v219 = vpop.permute.xlu0 %218
        %v221 = vld [vmem:[#allocation5] sm:$0xff]
        %v222 = vmul.f32 %v221, %v219
        %v223 = vadd.f32 %v216, %v222
        %224 = vrot.lane.b32.xlu0 %v215, 2
        %v225 = vpop.permute.xlu0 %224
        %v227 = vld [vmem:[#allocation5 + $0x8] sm:$0xff]
        %v228 = vmul.f32 %v227, %v225
        %v229 = vadd.f32 %v223, %v228
        %230 = vrot.lane.b32.xlu0 %v215, 1
        %v231 = vpop.permute.xlu0 %230
        %v233 = vld [vmem:[#allocation5 + $0x10] sm:$0xff]
        %v234 = vmul.f32 %v233, %v231
        %v235 = vadd.f32 %v229, %v234
        %v236 = vld [vmem:[#allocation5 + $0x18] sm:$0xff]
        %v237 = vmul.f32 %v236, %v215
        %v238 = vadd.f32 %v235, %v237
        %239 = vrot.lane.b32.xlu0 %v215, 127
        %v240 = vpop.permute.xlu0 %239
        %v242 = vld [vmem:[#allocation5 + $0x20] sm:$0xff]
        %v243 = vmul.f32 %v242, %v240
        %v244 = vadd.f32 %v238, %v243
        %245 = vrot.lane.b32.xlu0 %v215, 126
        %v246 = vpop.permute.xlu0 %245
        %v248 = vld [vmem:[#allocation5 + $0x28] sm:$0xff]
        %v249 = vmul.f32 %v248, %v246
        %v250 = vadd.f32 %v244, %v249
        %251 = vrot.lane.b32.xlu0 %v215, 125
        %v252 = vpop.permute.xlu0 %251
        %v254 = vld [vmem:[#allocation5 + $0x30] sm:$0xff]
        %v255 = vmul.f32 %v254, %v252
        %v256 = vadd.f32 %v250, %v255
        %257 = vrot.lane.b32.xlu0 %v215, 124
        %v258 = vpop.permute.xlu0 %257
        %v260 = vld [vmem:[#allocation5 + $0x38] sm:$0xff]
        %v261 = vmul.f32 %v260, %v258
        %v262 = vadd.f32 %v256, %v261
        %vm263 = vcmp.gt.f32.partialorder %v262, 0.0
        %v264 = vmin.f32 %v262, 0.0
        %v265 = vmul.f32 %v264, 1.442695
        %v266 = vpow.pop %v265
        %v267 = vsub.f32 %v266, 1.0
        %v268 = vsel %vm263, %v262, %v267
        %v269 = vld [vmem:[#allocation5 + $0xc0] sm:$0xff]
        %v270 = vld [vmem:[#allocation5 + $0xc8] sm:$0xff]
        %v271 = vld [vmem:[#allocation5 + $0xd0] sm:$0xff]
        %v272 = vld [vmem:[#allocation5 + $0xd8] sm:$0xff]
        %v273 = vld [vmem:[#allocation5 + $0xe0] sm:$0xff]
        %v274 = vld [vmem:[#allocation5 + $0xe8] sm:$0xff]
        %v275 = vld [vmem:[#allocation5 + $0xf0] sm:$0xff]
        %v276 = vld [vmem:[#allocation5 + $0xf8] sm:$0xff]
        %v277 = vld [vmem:[#allocation5 + $0x100] sm:$0xff]
        %v278 = vld [vmem:[#allocation5 + $0x108] sm:$0xff]
        %v279 = vld [vmem:[#allocation5 + $0x110] sm:$0xff]
        %v280 = vld [vmem:[#allocation5 + $0x118] sm:$0xff]
        %v281 = vld [vmem:[#allocation5 + $0x120] sm:$0xff]
        %v282 = vld [vmem:[#allocation5 + $0x128] sm:$0xff]
        %v283 = vld [vmem:[#allocation5 + $0x130] sm:$0xff]
        %v284 = vld [vmem:[#allocation5 + $0x138] sm:$0xff]
        %285 = vmatprep.subr.mxu0 0.0
        %286 = vmatpush1.msra.mxu0 %v269
        %287 = vmatprep.subr.mxu0 0.0
        %288 = vmatpush1.msra.mxu0 %v270
        %289 = vmatprep.subr.mxu0 0.0
        %290 = vmatpush1.msra.mxu0 %v271
        %291 = vmatprep.subr.mxu0 0.0
        %292 = vmatpush1.msra.mxu0 %v272
        %293 = vmatprep.subr.mxu0 0.0
        %294 = vmatpush1.msra.mxu0 %v273
        %295 = vmatprep.subr.mxu0 0.0
        %296 = vmatpush1.msra.mxu0 %v274
        %297 = vmatprep.subr.mxu0 0.0
        %298 = vmatpush1.msra.mxu0 %v275
        %299 = vmatprep.subr.mxu0 0.0
        %300 = vmatpush1.msra.mxu0 %v276
        %301 = vmatprep.subr.mxu0 0.0
        %302 = vmatpush1.msra.mxu0 %v277
        %303 = vmatprep.subr.mxu0 0.0
        %304 = vmatpush1.msra.mxu0 %v278
        %305 = vmatprep.subr.mxu0 0.0
        %306 = vmatpush1.msra.mxu0 %v279
        %307 = vmatprep.subr.mxu0 0.0
        %308 = vmatpush1.msra.mxu0 %v280
        %309 = vmatprep.subr.mxu0 0.0
        %310 = vmatpush1.msra.mxu0 %v281
        %311 = vmatprep.subr.mxu0 0.0
        %312 = vmatpush1.msra.mxu0 %v282
        %313 = vmatprep.subr.mxu0 0.0
        %314 = vmatpush1.msra.mxu0 %v283
        %315 = vmatprep.subr.mxu0 0.0
        %316 = vmatpush1.msra.mxu0 %v284
        %317 = vmatprep.subr.mxu0 0.0
        %318 = vmatpush1.msra.mxu0 0.0
        %319 = vmatprep.subr.mxu0 0.0
        %320 = vmatpush1.msra.mxu0 0.0
        %321 = vmatprep.subr.mxu0 0.0
        %322 = vmatpush1.msra.mxu0 0.0
        %323 = vmatprep.subr.mxu0 0.0
        %324 = vmatpush1.msra.mxu0 0.0
        %325 = vmatprep.subr.mxu0 0.0
        %326 = vmatpush1.msra.mxu0 0.0
        %327 = vmatprep.subr.mxu0 0.0
        %328 = vmatpush1.msra.mxu0 0.0
        %329 = vmatprep.subr.mxu0 0.0
        %330 = vmatpush1.msra.mxu0 0.0
        %331 = vmatprep.subr.mxu0 0.0
        %332 = vmatpush1.msra.mxu0 0.0
        %333 = vmatprep.subr.mxu0 0.0
        %334 = vmatpush1.msra.mxu0 0.0
        %335 = vmatprep.subr.mxu0 0.0
        %336 = vmatpush1.msra.mxu0 0.0
        %337 = vmatprep.subr.mxu0 0.0
        %338 = vmatpush1.msra.mxu0 0.0
        %339 = vmatprep.subr.mxu0 0.0
        %340 = vmatpush1.msra.mxu0 0.0
        %341 = vmatprep.subr.mxu0 0.0
        %342 = vmatpush1.msra.mxu0 0.0
        %343 = vmatprep.subr.mxu0 0.0
        %344 = vmatpush1.msra.mxu0 0.0
        %345 = vmatprep.subr.mxu0 0.0
        %346 = vmatpush1.msra.mxu0 0.0
        %347 = vmatprep.subr.mxu0 0.0
        %348 = vmatpush1.msra.mxu0 0.0
        %349 = vmatprep.mubr.f32.mxu0 0.0
        %350 = vmatmul.mubr.f32.gmra.mrb[0].mxu0 %v268
        %v351 = vpop.f32.mrb[0].mxu0
        %v352 = vadd.f32 0.0, %v351
        %v353 = vpop.f32.mrb[0].mxu0
        %354 = vdwg.mxu0
        %v356 = vrot.slane %v352, 1
        %357 = vrot.lane.b32.xlu0 %v356, 16
        %v358 = vpop.permute.xlu0 %357
        %v360 = vrot.slane %v352, 2
        %361 = vrot.lane.b32.xlu0 %v360, 32
        %v362 = vpop.permute.xlu0 %361
        %v364 = vrot.slane %v352, 3
        %365 = vrot.lane.b32.xlu0 %v364, 48
        %v366 = vpop.permute.xlu0 %365
        %v368 = vrot.slane %v352, 4
        %369 = vrot.lane.b32.xlu0 %v368, 64
        %v370 = vpop.permute.xlu0 %369
        %v372 = vrot.slane %v352, 5
        %373 = vrot.lane.b32.xlu0 %v372, 80
        %v374 = vpop.permute.xlu0 %373
        %v376 = vrot.slane %v352, 6
        %377 = vrot.lane.b32.xlu0 %v376, 96
        %v378 = vpop.permute.xlu0 %377
        %v380 = vrot.slane %v352, 7
        %381 = vrot.lane.b32.xlu0 %v380, 112
        %v382 = vpop.permute.xlu0 %381
        %vm384 = vcmask 130048
        %v385 = vsel %vm384, %v352, %v358
        %vm386 = vcmask 261120
        %v387 = vsel %vm386, %v385, %v362
        %vm388 = vcmask 392192
        %v389 = vsel %vm388, %v387, %v366
        %vm390 = vcmask 523264
        %v391 = vsel %vm390, %v389, %v370
        %vm392 = vcmask 654336
        %v393 = vsel %vm392, %v391, %v374
        %vm394 = vcmask 785408
        %v395 = vsel %vm394, %v393, %v378
        %vm396 = vcmask 916480
        %v397 = vsel %vm396, %v395, %v382
        %398 = vrot.lane.b32.xlu0 %v352, 112
        %v399 = vpop.permute.xlu0 %398
        %402 = vrot.lane.b32.xlu0 %v360, 16
        %v403 = vpop.permute.xlu0 %402
        %405 = vrot.lane.b32.xlu0 %v364, 32
        %v406 = vpop.permute.xlu0 %405
        %408 = vrot.lane.b32.xlu0 %v368, 48
        %v409 = vpop.permute.xlu0 %408
        %411 = vrot.lane.b32.xlu0 %v372, 64
        %v412 = vpop.permute.xlu0 %411
        %414 = vrot.lane.b32.xlu0 %v376, 80
        %v415 = vpop.permute.xlu0 %414
        %417 = vrot.lane.b32.xlu0 %v380, 96
        %v418 = vpop.permute.xlu0 %417
        %v420 = vsel %vm384, %v399, %v356
        %v421 = vsel %vm386, %v420, %v403
        %v422 = vsel %vm388, %v421, %v406
        %v423 = vsel %vm390, %v422, %v409
        %v424 = vsel %vm392, %v423, %v412
        %v425 = vsel %vm394, %v424, %v415
        %v426 = vsel %vm396, %v425, %v418
        %v428 = vrot.slane %v426, 7
        %vm430 = vcmask 1040384
        %v431 = vsel %vm430, %v397, %v428
        %v432 = vld [vmem:[#allocation5 + $0x40] sm:$0xff]
        %v433 = vld [vmem:[#allocation5 + $0x48] sm:$0xff]
        %v434 = vld [vmem:[#allocation5 + $0x50] sm:$0xff]
        %v435 = vld [vmem:[#allocation5 + $0x58] sm:$0xff]
        %v436 = vld [vmem:[#allocation5 + $0x60] sm:$0xff]
        %v437 = vld [vmem:[#allocation5 + $0x68] sm:$0xff]
        %v438 = vld [vmem:[#allocation5 + $0x70] sm:$0xff]
        %v439 = vld [vmem:[#allocation5 + $0x78] sm:$0xff]
        %v440 = vld [vmem:[#allocation5 + $0x80] sm:$0xff]
        %v441 = vld [vmem:[#allocation5 + $0x88] sm:$0xff]
        %v442 = vld [vmem:[#allocation5 + $0x90] sm:$0xff]
        %v443 = vld [vmem:[#allocation5 + $0x98] sm:$0xff]
        %v444 = vld [vmem:[#allocation5 + $0xa0] sm:$0xff]
        %v445 = vld [vmem:[#allocation5 + $0xa8] sm:$0xff]
        %v446 = vld [vmem:[#allocation5 + $0xb0] sm:$0xff]
        %v447 = vld [vmem:[#allocation5 + $0xb8] sm:$0xff]
        %v448 = vld [vmem:[#allocation5 + $0x1c0] sm:$0x1]
        %v449 = vlaneseq
        %v450 = vshrl.u32 %v449, 7
        %v451 = vsub.s32 0, %v450
        %v452 = vrot.slane %v448, %v451
        %453 = vmatprep.subr.mxu0 0.0
        %454 = vmatpush1.msra.mxu0 %v432
        %455 = vmatprep.subr.mxu0 0.0
        %456 = vmatpush1.msra.mxu0 %v433
        %457 = vmatprep.subr.mxu0 0.0
        %458 = vmatpush1.msra.mxu0 %v434
        %459 = vmatprep.subr.mxu0 0.0
        %460 = vmatpush1.msra.mxu0 %v435
        %461 = vmatprep.subr.mxu0 0.0
        %462 = vmatpush1.msra.mxu0 %v436
        %463 = vmatprep.subr.mxu0 0.0
        %464 = vmatpush1.msra.mxu0 %v437
        %465 = vmatprep.subr.mxu0 0.0
        %466 = vmatpush1.msra.mxu0 %v438
        %467 = vmatprep.subr.mxu0 0.0
        %468 = vmatpush1.msra.mxu0 %v439
        %469 = vmatprep.subr.mxu0 0.0
        %470 = vmatpush1.msra.mxu0 %v440
        %471 = vmatprep.subr.mxu0 0.0
        %472 = vmatpush1.msra.mxu0 %v441
        %473 = vmatprep.subr.mxu0 0.0
        %474 = vmatpush1.msra.mxu0 %v442
        %475 = vmatprep.subr.mxu0 0.0
        %476 = vmatpush1.msra.mxu0 %v443
        %477 = vmatprep.subr.mxu0 0.0
        %478 = vmatpush1.msra.mxu0 %v444
        %479 = vmatprep.subr.mxu0 0.0
        %480 = vmatpush1.msra.mxu0 %v445
        %481 = vmatprep.subr.mxu0 0.0
        %482 = vmatpush1.msra.mxu0 %v446
        %483 = vmatprep.subr.mxu0 0.0
        %484 = vmatpush1.msra.mxu0 %v447
        %485 = vmatprep.subr.mxu0 0.0
        %486 = vmatpush1.msra.mxu0 0.0
        %487 = vmatprep.subr.mxu0 0.0
        %488 = vmatpush1.msra.mxu0 0.0
        %489 = vmatprep.subr.mxu0 0.0
        %490 = vmatpush1.msra.mxu0 0.0
        %491 = vmatprep.subr.mxu0 0.0
        %492 = vmatpush1.msra.mxu0 0.0
        %493 = vmatprep.subr.mxu0 0.0
        %494 = vmatpush1.msra.mxu0 0.0
        %495 = vmatprep.subr.mxu0 0.0
        %496 = vmatpush1.msra.mxu0 0.0
        %497 = vmatprep.subr.mxu0 0.0
        %498 = vmatpush1.msra.mxu0 0.0
        %499 = vmatprep.subr.mxu0 0.0
        %500 = vmatpush1.msra.mxu0 0.0
        %501 = vmatprep.subr.mxu0 0.0
        %502 = vmatpush1.msra.mxu0 0.0
        %503 = vmatprep.subr.mxu0 0.0
        %504 = vmatpush1.msra.mxu0 0.0
        %505 = vmatprep.subr.mxu0 0.0
        %506 = vmatpush1.msra.mxu0 0.0
        %507 = vmatprep.subr.mxu0 0.0
        %508 = vmatpush1.msra.mxu0 0.0
        %509 = vmatprep.subr.mxu0 0.0
        %510 = vmatpush1.msra.mxu0 0.0
        %511 = vmatprep.subr.mxu0 0.0
        %512 = vmatpush1.msra.mxu0 0.0
        %513 = vmatprep.subr.mxu0 0.0
        %514 = vmatpush1.msra.mxu0 0.0
        %515 = vmatprep.subr.mxu0 0.0
        %516 = vmatpush1.msra.mxu0 0.0
        %517 = vmatprep.mubr.f32.mxu0 0.0
        %518 = vmatmul.mubr.f32.gmra.mrb[0].mxu0 %v431
        %v519 = vpop.f32.mrb[0].mxu0
        %v520 = vadd.f32 %v452, %v519
        %v521 = vpop.f32.mrb[0].mxu0
        %522 = vdwg.mxu0
        %vm523 = vcmp.gt.f32.partialorder %v520, 0.0
        %v524 = vmin.f32 %v520, 0.0
        %v525 = vmul.f32 %v524, 1.442695
        %v526 = vpow.pop %v525
        %v527 = vsub.f32 %v526, 1.0
        %v528 = vsel %vm523, %v520, %v527
        %v529 = vld [vmem:[#allocation5 + $0x140] sm:$0xff]
        %v530 = vld [vmem:[#allocation5 + $0x148] sm:$0xff]
        %v531 = vld [vmem:[#allocation5 + $0x150] sm:$0xff]
        %v532 = vld [vmem:[#allocation5 + $0x158] sm:$0xff]
        %v533 = vld [vmem:[#allocation5 + $0x160] sm:$0xff]
        %v534 = vld [vmem:[#allocation5 + $0x168] sm:$0xff]
        %v535 = vld [vmem:[#allocation5 + $0x170] sm:$0xff]
        %v536 = vld [vmem:[#allocation5 + $0x178] sm:$0xff]
        %v537 = vld [vmem:[#allocation5 + $0x180] sm:$0xff]
        %v538 = vld [vmem:[#allocation5 + $0x188] sm:$0xff]
        %v539 = vld [vmem:[#allocation5 + $0x190] sm:$0xff]
        %v540 = vld [vmem:[#allocation5 + $0x198] sm:$0xff]
        %v541 = vld [vmem:[#allocation5 + $0x1a0] sm:$0xff]
        %v542 = vld [vmem:[#allocation5 + $0x1a8] sm:$0xff]
        %v543 = vld [vmem:[#allocation5 + $0x1b0] sm:$0xff]
        %v544 = vld [vmem:[#allocation5 + $0x1b8] sm:$0xff]
        %v545 = vld [vmem:[#allocation5 + $0x1c1] sm:$0x1]
        %v546 = vlaneseq
        %v547 = vshrl.u32 %v546, 7
        %v548 = vsub.s32 0, %v547
        %v549 = vrot.slane %v545, %v548
        %550 = vmatprep.subr.mxu0 0.0
        %551 = vmatpush1.msra.mxu0 %v529
        %552 = vmatprep.subr.mxu0 0.0
        %553 = vmatpush1.msra.mxu0 %v530
        %554 = vmatprep.subr.mxu0 0.0
        %555 = vmatpush1.msra.mxu0 %v531
        %556 = vmatprep.subr.mxu0 0.0
        %557 = vmatpush1.msra.mxu0 %v532
        %558 = vmatprep.subr.mxu0 0.0
        %559 = vmatpush1.msra.mxu0 %v533
        %560 = vmatprep.subr.mxu0 0.0
        %561 = vmatpush1.msra.mxu0 %v534
        %562 = vmatprep.subr.mxu0 0.0
        %563 = vmatpush1.msra.mxu0 %v535
        %564 = vmatprep.subr.mxu0 0.0
        %565 = vmatpush1.msra.mxu0 %v536
        %566 = vmatprep.subr.mxu0 0.0
        %567 = vmatpush1.msra.mxu0 %v537
        %568 = vmatprep.subr.mxu0 0.0
        %569 = vmatpush1.msra.mxu0 %v538
        %570 = vmatprep.subr.mxu0 0.0
        %571 = vmatpush1.msra.mxu0 %v539
        %572 = vmatprep.subr.mxu0 0.0
        %573 = vmatpush1.msra.mxu0 %v540
        %574 = vmatprep.subr.mxu0 0.0
        %575 = vmatpush1.msra.mxu0 %v541
        %576 = vmatprep.subr.mxu0 0.0
        %577 = vmatpush1.msra.mxu0 %v542
        %578 = vmatprep.subr.mxu0 0.0
        %579 = vmatpush1.msra.mxu0 %v543
        %580 = vmatprep.subr.mxu0 0.0
        %581 = vmatpush1.msra.mxu0 %v544
        %582 = vmatprep.subr.mxu0 0.0
        %583 = vmatpush1.msra.mxu0 0.0
        %584 = vmatprep.subr.mxu0 0.0
        %585 = vmatpush1.msra.mxu0 0.0
        %586 = vmatprep.subr.mxu0 0.0
        %587 = vmatpush1.msra.mxu0 0.0
        %588 = vmatprep.subr.mxu0 0.0
        %589 = vmatpush1.msra.mxu0 0.0
        %590 = vmatprep.subr.mxu0 0.0
        %591 = vmatpush1.msra.mxu0 0.0
        %592 = vmatprep.subr.mxu0 0.0
        %593 = vmatpush1.msra.mxu0 0.0
        %594 = vmatprep.subr.mxu0 0.0
        %595 = vmatpush1.msra.mxu0 0.0
        %596 = vmatprep.subr.mxu0 0.0
        %597 = vmatpush1.msra.mxu0 0.0
        %598 = vmatprep.subr.mxu0 0.0
        %599 = vmatpush1.msra.mxu0 0.0
        %600 = vmatprep.subr.mxu0 0.0
        %601 = vmatpush1.msra.mxu0 0.0
        %602 = vmatprep.subr.mxu0 0.0
        %603 = vmatpush1.msra.mxu0 0.0
        %604 = vmatprep.subr.mxu0 0.0
        %605 = vmatpush1.msra.mxu0 0.0
        %606 = vmatprep.subr.mxu0 0.0
        %607 = vmatpush1.msra.mxu0 0.0
        %608 = vmatprep.subr.mxu0 0.0
        %609 = vmatpush1.msra.mxu0 0.0
        %610 = vmatprep.subr.mxu0 0.0
        %611 = vmatpush1.msra.mxu0 0.0
        %612 = vmatprep.subr.mxu0 0.0
        %613 = vmatpush1.msra.mxu0 0.0
        %614 = vmatprep.mubr.f32.mxu0 0.0
        %615 = vmatmul.mubr.f32.gmra.mrb[0].mxu0 %v528
        %v616 = vpop.f32.mrb[0].mxu0
        %v617 = vadd.f32 %v549, %v616
        %v618 = vpop.f32.mrb[0].mxu0
        %619 = vdwg.mxu0
        %vm620 = vcmask 25600
        %v621 = vsel %vm620, %v617, -inf
        %622 = vmax.xlane.f32.xlu0 %v621
        %v623 = vpop.xlane.xlu0 %622
        %v624 = vsub.f32 %v617, %v623
        %v625 = vmul.f32 %v624, 1.442695
        %v626 = vpow.pop %v625
        %v627 = vsel %vm620, %v626, 0.0
        %628 = vadd.xlane.f32.xlu0 %v627
        %v629 = vpop.xlane.xlu0 %628
        %v630 = vrcp.pop %v629
        %v631 = vmul.f32 %v626, %v630
        %632 = vst.msk [vmem:[%s173] sm:$0x3] %vm620, %v631
        %s633 = sand.u32 %s75, 1
        %s634 = scalar_lea.sflag [#allocation4], %s633
        %s635 = sand.u32 %s75, 1
        %s636 = smul.addr %s635, 2
        %s637 = scalar_lea.vmem [#allocation7], %s636
        // Predicated region
        $region37: #{tpu_custom_call.1} parent=27 // pred_check
          %p638 = pneg %p85
        $region38: #{tpu_custom_call.1} parent=27 // pred_check_branch
          %640 = sbr.rel (%p638) target = $region40
        $region39: #{tpu_custom_call.1} parent=27 // pred_region
          %s642 = ssub.s32 32, 32
          %643 = vsyncadd %s634, %s642
          %s644 = smul.addr %s20, 32
          %s645 = scalar_lea.hbm %s2, %s644
          %s647 = sshll.u32 %s637, 4
          %s648 = int_to_ptr.vmem [resolvable:$true] %s647
          %650 = dma.vmem_to_hbm [thread:$0]  %s648, 32, %s645, %s634
        $region40: #{tpu_custom_call.1} parent=27 // pred_fallthru
          _
      $region28: #{tpu_custom_call.1} parent=5 // pred_fallthru
        _
      %p651 = scmp.le.s32.totalorder 2, %s15
      // Predicated region
      $region41: #{tpu_custom_call.1} parent=5 // pred_check
        %p652 = pneg %p651
      $region42: #{tpu_custom_call.1} parent=5 // pred_check_branch
        %654 = sbr.rel (%p652) target = $region44
      $region43: #{tpu_custom_call.1} parent=5 // pred_region
        %s655 = ssub.s32 %s15, 2
        // Predicated region
        $region45: #{tpu_custom_call.1} parent=43 // pred_check
          %p656 = pneg %p91
        $region46: #{tpu_custom_call.1} parent=43 // pred_check_branch
          %658 = sbr.rel (%p656) target = $region48
        $region47: #{tpu_custom_call.1} parent=43 // pred_region
          %s659 = sand.u32 %s76, 1
          %s660 = scalar_lea.sflag [#allocation4], %s659
          %s661 = sand.u32 %s76, 1
          %s662 = smul.addr %s661, 2
          %s663 = scalar_lea.vmem [#allocation7], %s662
          %664 = dma.done %s660, 32
        $region48: #{tpu_custom_call.1} parent=43 // pred_fallthru
          _
      $region44: #{tpu_custom_call.1} parent=5 // pred_fallthru
        _
    $region6: #{tpu_custom_call.1} parent=1 // loop_footer
      %s19 = sadd.s32 1, %s15
    $region7: #{tpu_custom_call.1} parent=1 // loop_footer_branch
      %14 = sbr.rel target = $region3
    $region8: #{tpu_custom_call.1} parent=1 // loop_exit
      _
    %665 = vsyncpa [#allocation3], 1
    %s666 = scalar_lea.sflag [#allocation3], 1
    %667 = vsyncpa %s666, 1
    %668 = vsyncpa [#allocation6], 1
    %669 = vsyncpa [#allocation4], 1
    %s670 = scalar_lea.sflag [#allocation4], 1
    %671 = vsyncpa %s670, 1

</llo_original>
